<compile_context>
chip_gen: v7x
topology: tpu7x:2x2x1
jax: 0.10.0
libtpu: 0.0.40
codegen_flags: <defaults>
</compile_context>

<pallas_src>
import functools
import math

import jax
import jax.numpy as jnp
from jax.experimental import pallas as pl
from jax.experimental.pallas import tpu as pltpu

MM_DTYPE = jnp.bfloat16      # storage dtype for weights & inter-kernel activations

# matmul tile targets (shrunk automatically to divisors of the actual dims;
# sized so double-buffered bf16 tiles + f32 accumulators fit v7x's 64 MiB VMEM).
_TM, _TN, _TK = 256, 256, 512


def _pick_tile(n, target, align=8):
    """Largest divisor of n that is <= target (prefer `align`-multiples)."""
    if n <= target:
        return n
    best = None
    for t in range(target, 0, -1):
        if n % t == 0:
            if t % align == 0:
                return t
            if best is None:
                best = t
    return best if best is not None else n


# ---------------------------------------------------------------------------
# Kernels
# ---------------------------------------------------------------------------

def _rmsnorm_kernel(eps, x_ref, w_ref, o_ref):
    x = x_ref[...].astype(jnp.float32)
    ms = jnp.mean(x * x, axis=-1, keepdims=True)
    o_ref[...] = (x * jax.lax.rsqrt(ms + eps) * w_ref[...]).astype(o_ref.dtype)


def _fused_linear_kernel(has_bias, has_lora, has_res, *refs):
    # inputs: x, w, [bias], [lora_l1, lora_l2], [residual]; out; scratch: acc, [lacc]
    it = iter(refs)
    x_ref = next(it)
    w_ref = next(it)
    b_ref = next(it) if has_bias else None
    l1_ref = next(it) if has_lora else None
    l2_ref = next(it) if has_lora else None
    r_ref = next(it) if has_res else None
    o_ref = next(it)
    acc_ref = next(it)
    lacc_ref = next(it) if has_lora else None

    k = pl.program_id(2)

    @pl.when(k == 0)
    def _init():
        acc_ref[...] = jnp.zeros_like(acc_ref)
        if has_lora:
            lacc_ref[...] = jnp.zeros_like(lacc_ref)

    w = w_ref[...]
    x = x_ref[...].astype(w.dtype)
    acc_ref[...] += jnp.dot(x, w, preferred_element_type=jnp.float32)
    if has_lora:
        lacc_ref[...] += jnp.dot(x, l1_ref[...],
                                 preferred_element_type=jnp.float32)

    @pl.when(k == pl.num_programs(2) - 1)
    def _epilogue():
        out = acc_ref[...]
        if has_lora:
            l2 = l2_ref[...]
            out = out + jnp.dot(lacc_ref[...].astype(l2.dtype), l2,
                                preferred_element_type=jnp.float32)
        if has_bias:
            out = out + b_ref[...].astype(jnp.float32)
        if has_res:
            out = out + r_ref[...].astype(jnp.float32)
        o_ref[...] = out.astype(o_ref.dtype)


def _ffn_w13_kernel(x_ref, w1_ref, w3_ref, b1_ref, b3_ref,
                    l1a_ref, l1b_ref, l3a_ref, l3b_ref, o_ref,
                    acc1, acc3, lacc1, lacc3):
    # silu(x@w1 + lora1(x) + b1) * (x@w3 + lora3(x) + b3), SwiGLU in epilogue.
    k = pl.program_id(2)

    @pl.when(k == 0)
    def _init():
        acc1[...] = jnp.zeros_like(acc1)
        acc3[...] = jnp.zeros_like(acc3)
        lacc1[...] = jnp.zeros_like(lacc1)
        lacc3[...] = jnp.zeros_like(lacc3)

    w1 = w1_ref[...]
    x = x_ref[...].astype(w1.dtype)
    acc1[...] += jnp.dot(x, w1, preferred_element_type=jnp.float32)
    acc3[...] += jnp.dot(x, w3_ref[...], preferred_element_type=jnp.float32)
    lacc1[...] += jnp.dot(x, l1a_ref[...], preferred_element_type=jnp.float32)
    lacc3[...] += jnp.dot(x, l3a_ref[...], preferred_element_type=jnp.float32)

    @pl.when(k == pl.num_programs(2) - 1)
    def _epilogue():
        l1b = l1b_ref[...]
        l3b = l3b_ref[...]
        h1 = acc1[...] + jnp.dot(lacc1[...].astype(l1b.dtype), l1b,
                                 preferred_element_type=jnp.float32) + b1_ref[...]
        h3 = acc3[...] + jnp.dot(lacc3[...].astype(l3b.dtype), l3b,
                                 preferred_element_type=jnp.float32) + b3_ref[...]
        o_ref[...] = ((h1 * jax.lax.logistic(h1)) * h3).astype(o_ref.dtype)


def _split_rope_kernel(dim, n_heads, hd, qkv_ref, cos_ref, sin_ref,
                       oq_ref, ok_ref, ov_ref):
    # Read the fused (tq, 3*dim) QKV tile, split per head, apply RoPE to Q/K
    # (Q/K channels are pre-permuted per head to [real-half | imag-half] so
    #  RoPE is a lane-dense rotate-half) and write (H, tq, hd) tiles.
    half = hd // 2
    c = cos_ref[...].astype(jnp.float32)     # (tq, half)
    s = sin_ref[...].astype(jnp.float32)
    for h in range(n_heads):
        qo = h * hd
        ko = dim + h * hd
        vo = 2 * dim + h * hd
        q = qkv_ref[:, qo:qo + hd].astype(jnp.float32)
        k = qkv_ref[:, ko:ko + hd].astype(jnp.float32)
        qr, qi = q[:, :half], q[:, half:]
        kr, ki = k[:, :half], k[:, half:]
        oq_ref[h] = jnp.concatenate([qr * c - qi * s, qr * s + qi * c],
                                    axis=-1).astype(oq_ref.dtype)
        ok_ref[h] = jnp.concatenate([kr * c - ki * s, kr * s + ki * c],
                                    axis=-1).astype(ok_ref.dtype)
        ov_ref[h] = qkv_ref[:, vo:vo + hd]


def _flash_kernel(scale, causal, q_ref, k_ref, v_ref, o_ref, m_sc, l_sc, acc_sc):
    tq, _ = q_ref.shape
    tkv = k_ref.shape[0]
    qi = pl.program_id(2)
    ki = pl.program_id(3)

    @pl.when(ki == 0)
    def _init():
        m_sc[...] = jnp.full_like(m_sc, -jnp.inf)
        l_sc[...] = jnp.zeros_like(l_sc)
        acc_sc[...] = jnp.zeros_like(acc_sc)

    def update():
        q = q_ref[...]                        # (tq, hd) bf16
        k = k_ref[...]                        # (tkv, hd) bf16
        s = jax.lax.dot_general(q, k, (((1,), (1,)), ((), ())),
                                preferred_element_type=jnp.float32) * scale
        if causal:
            qpos = qi * tq + jax.lax.broadcasted_iota(jnp.int32, (tq, tkv), 0)
            kpos = ki * tkv + jax.lax.broadcasted_iota(jnp.int32, (tq, tkv), 1)
            s = jnp.where(qpos >= kpos, s, -jnp.inf)
        m_prev = m_sc[...]
        m_new = jnp.maximum(m_prev, jnp.max(s, axis=-1, keepdims=True))
        alpha = jnp.exp(m_prev - m_new)
        p = jnp.exp(s - m_new)
        l_sc[...] = alpha * l_sc[...] + jnp.sum(p, axis=-1, keepdims=True)
        acc_sc[...] = alpha * acc_sc[...] + jnp.dot(
            p.astype(v_ref.dtype), v_ref[...], preferred_element_type=jnp.float32)
        m_sc[...] = m_new

    if causal:
        # skip kv tiles strictly above the causal diagonal (their DMA is also
        # skipped by the clamped kv index_map in the wrapper)
        @pl.when(ki * tkv <= qi * tq + (tq - 1))
        def _update():
            update()
    else:
        update()

    @pl.when(ki == pl.num_programs(3) - 1)
    def _finalize():
        o_ref[...] = (acc_sc[...] * pl.reciprocal(l_sc[...], approx=True)
                      ).astype(o_ref.dtype)


# ---------------------------------------------------------------------------
# pallas_call wrappers
# ---------------------------------------------------------------------------

def rmsnorm(x, w, eps):
    m, d = x.shape
    tr = _pick_tile(m, _TM, align=16)
    return pl.pallas_call(
        functools.partial(_rmsnorm_kernel, eps),
        grid=(m // tr,),
        in_specs=[pl.BlockSpec((tr, d), lambda i: (i, 0)),
                  pl.BlockSpec((1, d), lambda i: (0, 0))],
        out_specs=pl.BlockSpec((tr, d), lambda i: (i, 0)),
        out_shape=jax.ShapeDtypeStruct((m, d), MM_DTYPE),
        compiler_params=pltpu.CompilerParams(dimension_semantics=("parallel",)),
    )(x, w)


def fused_linear(x, wt, bias=None, lora=None, residual=None, out_dtype=None):
    """o = x @ wt (+ (x@l1)@l2) (+ bias) (+ residual); wt is [in, out]."""
    m, kdim = x.shape
    n = wt.shape[1]
    tm = _pick_tile(m, _TM, align=16)
    tn = _pick_tile(n, _TN, align=128)
    tk = _pick_tile(kdim, _TK, align=128)
    grid = (m // tm, n // tn, kdim // tk)

    has_bias = bias is not None
    has_lora = lora is not None
    has_res = residual is not None
    out_dtype = MM_DTYPE if out_dtype is None else out_dtype

    inputs = [x, wt]
    in_specs = [pl.BlockSpec((tm, tk), lambda i, j, k: (i, k)),
                pl.BlockSpec((tk, tn), lambda i, j, k: (k, j))]
    if has_bias:
        inputs.append(bias)
        in_specs.append(pl.BlockSpec((1, tn), lambda i, j, k: (0, j)))
    if has_lora:
        l1t, l2t = lora
        r = l1t.shape[1]
        inputs += [l1t, l2t]
        in_specs += [pl.BlockSpec((tk, r), lambda i, j, k: (k, 0)),
                     pl.BlockSpec((r, tn), lambda i, j, k: (0, j))]
    if has_res:
        inputs.append(residual)
        in_specs.append(pl.BlockSpec((tm, tn), lambda i, j, k: (i, j)))

    scratch = [pltpu.VMEM((tm, tn), jnp.float32)]
    if has_lora:
        scratch.append(pltpu.VMEM((tm, lora[0].shape[1]), jnp.float32))

    return pl.pallas_call(
        functools.partial(_fused_linear_kernel, has_bias, has_lora, has_res),
        grid=grid,
        in_specs=in_specs,
        out_specs=pl.BlockSpec((tm, tn), lambda i, j, k: (i, j)),
        out_shape=jax.ShapeDtypeStruct((m, n), out_dtype),
        scratch_shapes=scratch,
        compiler_params=pltpu.CompilerParams(
            dimension_semantics=("parallel", "parallel", "arbitrary")),
    )(*inputs)


def head_merge_linear(x4, wt, bias=None, lora=None, residual=None):
    """wo projection reading attention output directly in (B, H, S, hd) layout.

    Contraction runs over the head axis (K blocks of size hd), so the
    merge-heads transpose never materializes in HBM.  Same kernel as
    fused_linear; residual / bias / LoRA fused in the epilogue.
    """
    b, n_heads, s, hd = x4.shape
    n = wt.shape[1]
    tm = _pick_tile(s, _TM, align=16)
    st = s // tm
    tn = _pick_tile(n, _TN, align=128)
    grid = (b * st, n // tn, n_heads)

    has_bias = bias is not None
    has_lora = lora is not None
    has_res = residual is not None

    inputs = [x4, wt]
    in_specs = [
        pl.BlockSpec((None, None, tm, hd),
                     lambda i, j, h: (i // st, h, i % st, 0)),
        pl.BlockSpec((hd, tn), lambda i, j, h: (h, j)),
    ]
    if has_bias:
        inputs.append(bias)
        in_specs.append(pl.BlockSpec((1, tn), lambda i, j, h: (0, j)))
    if has_lora:
        l1t, l2t = lora
        r = l1t.shape[1]
        inputs += [l1t, l2t]
        in_specs += [pl.BlockSpec((hd, r), lambda i, j, h: (h, 0)),
                     pl.BlockSpec((r, tn), lambda i, j, h: (0, j))]
    if has_res:
        inputs.append(residual)
        in_specs.append(pl.BlockSpec((tm, tn), lambda i, j, h: (i, j)))

    scratch = [pltpu.VMEM((tm, tn), jnp.float32)]
    if has_lora:
        scratch.append(pltpu.VMEM((tm, lora[0].shape[1]), jnp.float32))

    return pl.pallas_call(
        functools.partial(_fused_linear_kernel, has_bias, has_lora, has_res),
        grid=grid,
        in_specs=in_specs,
        out_specs=pl.BlockSpec((tm, tn), lambda i, j, h: (i, j)),
        out_shape=jax.ShapeDtypeStruct((b * s, n), MM_DTYPE),
        scratch_shapes=scratch,
        compiler_params=pltpu.CompilerParams(
            dimension_semantics=("parallel", "parallel", "arbitrary")),
    )(*inputs)


def ffn_w13(x, fp):
    m, kdim = x.shape
    n = fp['w1_t'].shape[1]
    r = fp['w1_lora'][0].shape[1]
    tm = _pick_tile(m, _TM, align=16)
    tn = _pick_tile(n, _TN, align=128)
    tk = _pick_tile(kdim, _TK, align=128)
    grid = (m // tm, n // tn, kdim // tk)

    x_spec = pl.BlockSpec((tm, tk), lambda i, j, k: (i, k))
    w_spec = pl.BlockSpec((tk, tn), lambda i, j, k: (k, j))
    b_spec = pl.BlockSpec((1, tn), lambda i, j, k: (0, j))
    la_spec = pl.BlockSpec((tk, r), lambda i, j, k: (k, 0))
    lb_spec = pl.BlockSpec((r, tn), lambda i, j, k: (0, j))

    return pl.pallas_call(
        _ffn_w13_kernel,
        grid=grid,
        in_specs=[x_spec, w_spec, w_spec, b_spec, b_spec,
                  la_spec, lb_spec, la_spec, lb_spec],
        out_specs=pl.BlockSpec((tm, tn), lambda i, j, k: (i, j)),
        out_shape=jax.ShapeDtypeStruct((m, n), MM_DTYPE),
        scratch_shapes=[pltpu.VMEM((tm, tn), jnp.float32),
                        pltpu.VMEM((tm, tn), jnp.float32),
                        pltpu.VMEM((tm, r), jnp.float32),
                        pltpu.VMEM((tm, r), jnp.float32)],
        compiler_params=pltpu.CompilerParams(
            dimension_semantics=("parallel", "parallel", "arbitrary")),
    )(x, fp['w1_t'], fp['w3_t'], fp['b1'], fp['b3'],
      fp['w1_lora'][0], fp['w1_lora'][1], fp['w3_lora'][0], fp['w3_lora'][1])


def split_heads_rope(qkv, cos, sin, b, s, n_heads, dim):
    """(B*S, 3*dim) fused QKV -> RoPE'd Q, K and V, each (B, H, S, hd)."""
    hd = dim // n_heads
    half = hd // 2
    tq = _pick_tile(s, 256, align=16)
    st = s // tq
    grid = (b, st)

    qkv_spec = pl.BlockSpec((tq, 3 * dim), lambda bi, qi: (bi * st + qi, 0))
    cs_spec = pl.BlockSpec((tq, half), lambda bi, qi: (qi, 0))
    out_spec = pl.BlockSpec((None, n_heads, tq, hd), lambda bi, qi: (bi, 0, qi, 0))
    out_shape = jax.ShapeDtypeStruct((b, n_heads, s, hd), MM_DTYPE)

    return pl.pallas_call(
        functools.partial(_split_rope_kernel, dim, n_heads, hd),
        grid=grid,
        in_specs=[qkv_spec, cs_spec, cs_spec],
        out_specs=(out_spec, out_spec, out_spec),
        out_shape=(out_shape, out_shape, out_shape),
        compiler_params=pltpu.CompilerParams(
            dimension_semantics=("parallel", "parallel")),
    )(qkv, cos, sin)


def flash_attention(q, k, v, scale, causal):
    """q, k, v: (B, H, S, hd).  Returns (B, H, S, hd)."""
    b, n_heads, s, hd = q.shape
    tq = _pick_tile(s, 128, align=16)    # small q tile: keep the f32 score tile
    tkv = _pick_tile(s, 256, align=16)   # well inside the vreg file
    nq, nkv = s // tq, s // tkv
    grid = (b, n_heads, nq, nkv)

    q_spec = pl.BlockSpec((None, None, tq, hd),
                          lambda bi, hi, qi, ki: (bi, hi, qi, 0))

    if causal:
        # Clamp kv tiles past the causal diagonal to the diagonal tile: the
        # pipeline skips the DMA when the block index doesn't change, so fully
        # masked K/V tiles are never fetched from HBM.
        def kv_index(bi, hi, qi, ki):
            last = (qi * tq + (tq - 1)) // tkv
            return (bi, hi, jnp.minimum(ki, last), 0)
    else:
        def kv_index(bi, hi, qi, ki):
            return (bi, hi, ki, 0)
    kv_spec = pl.BlockSpec((None, None, tkv, hd), kv_index)

    # TODO(synk): on v6e/v7x (256-wide MXU) process 2-4 heads per grid step to
    # widen the PV matmul output when hd < 256.
    return pl.pallas_call(
        functools.partial(_flash_kernel, scale, causal),
        grid=grid,
        in_specs=[q_spec, kv_spec, kv_spec],
        out_specs=pl.BlockSpec((None, None, tq, hd),
                               lambda bi, hi, qi, ki: (bi, hi, qi, 0)),
        out_shape=jax.ShapeDtypeStruct((b, n_heads, s, hd), q.dtype),
        scratch_shapes=[pltpu.VMEM((tq, 1), jnp.float32),
                        pltpu.VMEM((tq, 1), jnp.float32),
                        pltpu.VMEM((tq, hd), jnp.float32)],
        compiler_params=pltpu.CompilerParams(
            dimension_semantics=("parallel", "parallel", "parallel", "arbitrary")),
    )(q, k, v)


# ---------------------------------------------------------------------------
# Forward pass
# ---------------------------------------------------------------------------

def transformer_forward(params, tokens, start_pos=0):
    # Reference training-mode path (no KV cache) asserts start_pos == 0.
    assert start_pos == 0, "no-KV-cache path requires start_pos == 0"
    b, s = tokens.shape
    dim = params['dim']
    n_heads = params['n_heads']
    hd = dim // n_heads
    eps = params['norm_eps']
    scale = 1.0 / math.sqrt(hd)
    causal = s > 1

    # TODO(synk): token-embedding gather is data-dependent; kept in plain JAX.
    h2 = params['tok_embeddings'][tokens].reshape(b * s, dim).astype(MM_DTYPE)

    cos = params['freqs_cos'][start_pos:start_pos + s]       # (S, hd//2)
    sin = params['freqs_sin'][start_pos:start_pos + s]

    for lp in params['layers']:
        # ---- attention block -------------------------------------------------
        xn = rmsnorm(h2, lp['attention_norm'], eps)
        qkv = fused_linear(xn, lp['wqkv_t'], bias=lp.get('qkv_b'),
                           lora=lp.get('qkv_lora'))          # (B*S, 3*dim) bf16
        # split heads + RoPE directly from the fused buffer -> (B, H, S, hd)
        q4, k4, v4 = split_heads_rope(qkv, cos, sin, b, s, n_heads, dim)
        attn4 = flash_attention(q4, k4, v4, scale, causal)   # (B, H, S, hd)
        # output projection over the head axis (+ bias + LoRA + residual fused)
        h2 = head_merge_linear(attn4, lp['wo_t'], bias=lp.get('wo_b'),
                               lora=lp.get('wo_lora'), residual=h2)

        # ---- feed-forward block ---------------------------------------------
        xn2 = rmsnorm(h2, lp['ffn_norm'], eps)
        g = ffn_w13(xn2, lp['ffn'])                          # silu(w1)*w3 gated
        h2 = fused_linear(g, lp['ffn']['w2_t'], bias=lp['ffn']['b2'],
                          lora=lp['ffn']['w2_lora'], residual=h2)

    # final norm + logits on the last position only (B rows, not B*S)
    last = h2.reshape(b, s, dim)[:, -1, :]                   # (B, dim)
    last_n = rmsnorm(last, params['norm'], eps)
    logits = fused_linear(last_n, params['output_t'], out_dtype=jnp.float32)
    return logits


# ---------------------------------------------------------------------------
# Parameter construction (PyTorch layout) + one-time Pallas-friendly prep
# ---------------------------------------------------------------------------

def _precompute_freqs(dim, end, theta=10000.0):
    freqs = 1.0 / (theta ** (jnp.arange(0, dim, 2)[: dim // 2]
                             .astype(jnp.float32) / dim))
    t = jnp.arange(end, dtype=jnp.float32)
    f = jnp.outer(t, freqs)
    return jnp.cos(f), jnp.sin(f)


def init_raw_params(key, *, dim, n_layers, n_heads, vocab_size, multiple_of,
                    lora_rank, norm_eps, max_seq_len):
    keys = [key]

    def nxt():
        keys[0], sub = jax.random.split(keys[0])
        return sub

    def w(shape, scale=0.02):
        return scale * jax.random.normal(nxt(), shape, jnp.float32)

    hidden_dim = 4 * dim
    hidden_dim = int(2 * hidden_dim / 3)
    hidden_dim = multiple_of * ((hidden_dim + multiple_of - 1) // multiple_of)

    layers = []
    # ModelArgs defaults: w_bias=False, w_lora=False.  FeedForward.__init__
    # mutates the shared args to (True, True), so attention in layers >= 1
    # gains bias + LoRA — faithfully reproduce that quirk here.
    # (Reference inits LoRA l2 to zero; random values here exercise the path.)
    w_bias, w_lora = False, False
    for _ in range(n_layers):
        lp = {
            'attention_norm': jnp.ones((dim,), jnp.float32),
            'ffn_norm': jnp.ones((dim,), jnp.float32),
            'wq': w((dim, dim)), 'wk': w((dim, dim)),
            'wv': w((dim, dim)), 'wo': w((dim, dim)),
            'attn_lora': w_lora,
        }
        if w_bias:
            lp['wq_b'] = jnp.zeros((dim,), jnp.float32)
            lp['wo_b'] = jnp.zeros((dim,), jnp.float32)
        if w_lora:
            for name in ('wq', 'wk', 'wv', 'wo'):
                lp[f'lora_{name}_l1'] = w((lora_rank, dim))
                lp[f'lora_{name}_l2'] = w((dim, lora_rank))
        w_bias, w_lora = True, True  # FeedForward(lora=True, bias=True) mutation
        lp['ffn'] = {
            'w1': w((hidden_dim, dim)), 'b1': jnp.zeros((hidden_dim,), jnp.float32),
            'w2': w((dim, hidden_dim)), 'b2': jnp.zeros((dim,), jnp.float32),
            'w3': w((hidden_dim, dim)), 'b3': jnp.zeros((hidden_dim,), jnp.float32),
            'lora_w1_l1': w((lora_rank, dim)), 'lora_w1_l2': w((hidden_dim, lora_rank)),
            'lora_w2_l1': w((lora_rank, hidden_dim)), 'lora_w2_l2': w((dim, lora_rank)),
            'lora_w3_l1': w((lora_rank, dim)), 'lora_w3_l2': w((hidden_dim, lora_rank)),
        }
        layers.append(lp)

    cos, sin = _precompute_freqs(dim // n_heads, max_seq_len * 2)
    return {
        'dim': dim, 'n_heads': n_heads, 'norm_eps': norm_eps,
        'tok_embeddings': w((vocab_size, dim), scale=1.0),
        'layers': layers,
        'norm': jnp.ones((dim,), jnp.float32),
        'output': w((vocab_size, dim)),
        'freqs_cos': cos, 'freqs_sin': sin,
    }


def prepare_params(raw):
    """One-time prep: transpose to [in,out] and cast to bf16, fuse QKV /
    block-diag LoRA, permute Q/K head channels to [evens|odds] so RoPE is a
    lane-dense rotate-half (q.k dots invariant under the shared per-head perm)."""
    dim = raw['dim']
    n_heads = raw['n_heads']
    hd = dim // n_heads
    dt = MM_DTYPE

    perm_head = jnp.concatenate([jnp.arange(0, hd, 2), jnp.arange(1, hd, 2)])
    perm = (jnp.arange(n_heads)[:, None] * hd + perm_head[None, :]).reshape(-1)

    def mt(w):   # PyTorch (out, in) -> (in, out), cast to matmul dtype
        return jnp.transpose(w).astype(dt)

    layers = []
    for lp in raw['layers']:
        wq_t = mt(lp['wq'])[:, perm]
        wk_t = mt(lp['wk'])[:, perm]
        wv_t = mt(lp['wv'])
        new = {
            'attention_norm': lp['attention_norm'].reshape(1, dim),
            'ffn_norm': lp['ffn_norm'].reshape(1, dim),
            'wqkv_t': jnp.concatenate([wq_t, wk_t, wv_t], axis=1),
            'wo_t': mt(lp['wo']),
        }
        if 'wq_b' in lp:
            new['qkv_b'] = jnp.concatenate(
                [lp['wq_b'][perm], jnp.zeros((2 * dim,), jnp.float32)]
            ).reshape(1, 3 * dim)
            new['wo_b'] = lp['wo_b'].reshape(1, dim)
        if lp['attn_lora']:
            r = lp['lora_wq_l1'].shape[0]
            l1 = jnp.concatenate([mt(lp['lora_wq_l1']),
                                  mt(lp['lora_wk_l1']),
                                  mt(lp['lora_wv_l1'])], axis=1)      # (dim, 3r)
            l2 = jnp.zeros((3 * r, 3 * dim), dt)                       # block-diag
            l2 = l2.at[0:r, 0:dim].set(mt(lp['lora_wq_l2'])[:, perm])
            l2 = l2.at[r:2 * r, dim:2 * dim].set(mt(lp['lora_wk_l2'])[:, perm])
            l2 = l2.at[2 * r:3 * r, 2 * dim:3 * dim].set(mt(lp['lora_wv_l2']))
            new['qkv_lora'] = (l1, l2)
            new['wo_lora'] = (mt(lp['lora_wo_l1']), mt(lp['lora_wo_l2']))
        fp = lp['ffn']
        hidden = fp['w1'].shape[0]
        new['ffn'] = {
            'w1_t': mt(fp['w1']), 'w3_t': mt(fp['w3']), 'w2_t': mt(fp['w2']),
            'b1': fp['b1'].reshape(1, hidden),
            'b3': fp['b3'].reshape(1, hidden),
            'b2': fp['b2'].reshape(1, dim),
            'w1_lora': (mt(fp['lora_w1_l1']), mt(fp['lora_w1_l2'])),
            'w3_lora': (mt(fp['lora_w3_l1']), mt(fp['lora_w3_l2'])),
            'w2_lora': (mt(fp['lora_w2_l1']), mt(fp['lora_w2_l2'])),
        }
        layers.append(new)

    return {
        'dim': dim, 'n_heads': n_heads, 'norm_eps': raw['norm_eps'],
        'tok_embeddings': raw['tok_embeddings'],
        'layers': layers,
        'norm': raw['norm'].reshape(1, dim),
        'output_t': mt(raw['output']),
        'freqs_cos': raw['freqs_cos'], 'freqs_sin': raw['freqs_sin'],
    }


if __name__ == "__main__":
    key = jax.random.PRNGKey(0)
    pkey, tkey = jax.random.split(key)

    dim, n_layers, n_heads, vocab = 32, 2, 4, 64
    raw = init_raw_params(pkey, dim=dim, n_layers=n_layers, n_heads=n_heads,
                          vocab_size=vocab, multiple_of=32, lora_rank=8,
                          norm_eps=1e-5, max_seq_len=16)
    params = prepare_params(raw)

    tokens = jax.random.randint(tkey, (2, 8), 0, vocab, dtype=jnp.int32)
    logits = transformer_forward(params, tokens, start_pos=0)
    jax.block_until_ready(logits)

    assert logits.shape == (2, vocab), logits.shape
    assert logits.dtype == jnp.float32
    assert bool(jnp.all(jnp.isfinite(logits)))
    print("KERNEL_OK")
</pallas_src>

<mosaic_0001>
module attributes {stable_mosaic.version = 11 : i64} {
  func.func @_rmsnorm_kernel(%arg0: i32, %arg1: memref<16x32xbf16, #tpu.memory_space<vmem>>, %arg2: memref<1x32xf32, #tpu.memory_space<vmem>>, %arg3: memref<16x32xbf16, #tpu.memory_space<vmem>>) attributes {dimension_semantics = [#tpu.dimension_semantics<parallel>], iteration_bounds = array<i64: 1>, scalar_prefetch = 0 : i64, scratch_operands = 0 : i64, tpu.core_type = #tpu.core_type<tc>, window_params = [{transform_indices = @transform_0, window_bounds = array<i64: 16, 32>}, {pipeline_mode = #tpu.pipeline_mode<synchronous>, transform_indices = @transform_1, window_bounds = array<i64: 1, 32>}, {transform_indices = @transform_2, window_bounds = array<i64: 16, 32>}]} {
    %c0 = arith.constant 0 : index
    %c0_0 = arith.constant 0 : index
    %0 = vector.load %arg1[%c0, %c0_0] : memref<16x32xbf16, #tpu.memory_space<vmem>>, vector<16x32xbf16>
    %1 = arith.extf %0 : vector<16x32xbf16> to vector<16x32xf32>
    %2 = arith.mulf %1, %1 : vector<16x32xf32>
    %cst = arith.constant dense<0.000000e+00> : vector<16xf32>
    %3 = vector.multi_reduction <add>, %2, %cst [1] : vector<16x32xf32> to vector<16xf32>
    %4 = vector.shape_cast %3 : vector<16xf32> to vector<16x1xf32>
    %cst_1 = arith.constant 3.200000e+01 : f32
    %5 = vector.broadcast %cst_1 : f32 to vector<16x1xf32>
    %6 = arith.divf %4, %5 : vector<16x1xf32>
    %cst_2 = arith.constant 9.99999974E-6 : f32
    %7 = vector.broadcast %cst_2 : f32 to vector<16x1xf32>
    %8 = arith.addf %6, %7 : vector<16x1xf32>
    %9 = math.rsqrt %8 : vector<16x1xf32>
    %10 = vector.broadcast %9 : vector<16x1xf32> to vector<16x32xf32>
    %11 = arith.mulf %1, %10 : vector<16x32xf32>
    %c0_3 = arith.constant 0 : index
    %c0_4 = arith.constant 0 : index
    %12 = vector.load %arg2[%c0_3, %c0_4] : memref<1x32xf32, #tpu.memory_space<vmem>>, vector<1x32xf32>
    %13 = vector.broadcast %12 : vector<1x32xf32> to vector<16x32xf32>
    %14 = arith.mulf %11, %13 : vector<16x32xf32>
    %15 = arith.truncf %14 : vector<16x32xf32> to vector<16x32xbf16>
    %c0_5 = arith.constant 0 : index
    %c0_6 = arith.constant 0 : index
    %16 = vector.load %arg3[%c0_5, %c0_6] : memref<16x32xbf16, #tpu.memory_space<vmem>>, vector<16x32xbf16>
    tpu.vector_store %arg3[%c0_5, %c0_6], %15 {strides = array<i32>} : memref<16x32xbf16, #tpu.memory_space<vmem>>, vector<16x32xbf16>,
    return
  }
  func.func @transform_0(%arg0: i32) -> (i32, i32) {
    %c0_i32 = arith.constant 0 : i32
    %c0_i32_0 = arith.constant 0 : i32
    return %arg0, %c0_i32 : i32, i32
  }
  func.func @transform_1(%arg0: i32) -> (i32, i32) {
    %c0_i32 = arith.constant 0 : i32
    %c0_i32_0 = arith.constant 0 : i32
    %c0_i32_1 = arith.constant 0 : i32
    return %c0_i32, %c0_i32_0 : i32, i32
  }
  func.func @transform_2(%arg0: i32) -> (i32, i32) {
    %c0_i32 = arith.constant 0 : i32
    %c0_i32_0 = arith.constant 0 : i32
    return %arg0, %c0_i32 : i32, i32
  }
}

</mosaic_0001>

<llo_original>
// kernel: tpu_custom_call.1
$region0: #{tpu_custom_call.1}
  #allocation0 [shape = 'u32[]', space=smem, size = 0x4, offset = 0x4, fixed_abs, tag = 'smem constant byte address 0x4 - core index']
  #allocation1 [shape = 'u32[144,128]{1,0:T(1,128)}', space=vmem, size = 0x12000, scoped, tag = 'internal scratch']
  %s0 = inlined_call_operand.hbm [shape: bf16[16,32], index: 0, kind: input, shape index: {}]
  %s1 = inlined_call_operand.vmem [shape: f32[1,32], index: 1, kind: input, shape index: {}]
  %s2 = inlined_call_operand.hbm [shape: bf16[16,32], index: 2, kind: output, shape index: {}]
  %s3 = sld [smem:[#allocation0]]
  $region22: #{tpu_custom_call.1} parent=0
    _
  %s5 = ssub.s32 1, %s3
  %s6 = scalar_select 0, %s5, %s3
  $region1: #{tpu_custom_call.1} parent=0
    #allocation2 [shape = 'u8[4096]{0}', space=vmem, size = 0x1000, scoped, tag = 'input window, operand 0, single buffered']
    #allocation3 [shape = 's32[1]{0}', space=sflag, size = 0x4, scoped, tag = 'scoped memory for tpu_custom_call.1']
    #allocation4 [shape = 's32[1]{0}', space=sflag, size = 0x4, scoped, tag = 'scoped memory for tpu_custom_call.1']
    #allocation5 [shape = 'u8[4096]{0}', space=vmem, size = 0x1000, scoped, tag = 'output window, operand 0, single buffered']
    %7 = vsyncpa [#allocation3], 0
    %8 = vsyncpa [#allocation4], 0
    // Predicated region
    $region2: #{tpu_custom_call.1} parent=1 // pred_check
      _
    $region3: #{tpu_custom_call.1} parent=1 // pred_check_branch
      %10 = sbr.rel (0) target = $region5
    $region4: #{tpu_custom_call.1} parent=1 // pred_region
      %s12 = ssub.s32 128, 128
      %13 = vsyncadd [#allocation3], %s12
      %s14 = sshll.u32 [#allocation2], 4
      %s15 = int_to_ptr.vmem [resolvable:$true] %s14
      %20 = dma.hbm_to_vmem [thread:$0]  %s0, 128, %s15, [#allocation3], 64, 64, 4
    $region5: #{tpu_custom_call.1} parent=1 // pred_fallthru
      _
    // Predicated region
    $region6: #{tpu_custom_call.1} parent=1 // pred_check
      _
    $region7: #{tpu_custom_call.1} parent=1 // pred_check_branch
      %22 = sbr.rel (0) target = $region9
    $region8: #{tpu_custom_call.1} parent=1 // pred_region
      _
    $region9: #{tpu_custom_call.1} parent=1 // pred_fallthru
      _
    // Predicated region
    $region10: #{tpu_custom_call.1} parent=1 // pred_check
      _
    $region11: #{tpu_custom_call.1} parent=1 // pred_check_branch
      %24 = sbr.rel (0) target = $region13
    $region12: #{tpu_custom_call.1} parent=1 // pred_region
      %25 = dma.done [#allocation3], 128
    $region13: #{tpu_custom_call.1} parent=1 // pred_fallthru
      _
    %v26 = vld [vmem:[#allocation2] sm:$0xf]
    %v27 = vld [vmem:[#allocation2 + $0x4] sm:$0xf]
    %v28 = vunpack.c.l.bf16 %v26
    %v29 = vunpack.c.l.bf16 %v27
    %v30 = vmul.f32 %v28, %v28
    %v31 = vmul.f32 %v29, %v29
    %vm32 = vcmask 261120
    %v33 = vsel %vm32, %v30, 0.0
    %34 = vadd.xlane.f32.xlu0 %v33
    %v35 = vpop.xlane.xlu0 %34
    %v36 = vsel %vm32, %v31, 0.0
    %37 = vadd.xlane.f32.xlu0 %v36
    %v38 = vpop.xlane.xlu0 %37
    %v39 = vrcp.pop 32.0
    %v40 = vmul.f32 %v35, %v39
    %v41 = vmul.f32 %v38, %v39
    %v42 = vadd.f32 %v40, 1e-05
    %v43 = vadd.f32 %v41, 1e-05
    %v44 = vrsqrt.pop %v42
    %v45 = vrsqrt.pop %v43
    %v46 = vmul.f32 %v28, %v44
    %v47 = vmul.f32 %v29, %v45
    %v48 = vld [vmem:[%s1] sm:$0x1]
    %v50 = vlaneseq
    %v51 = vshrl.u32 %v50, 7
    %v52 = vsub.s32 0, %v51
    %v53 = vrot.slane %v48, %v52
    %v55 = vmul.f32 %v46, %v53
    %v56 = vmul.f32 %v47, %v53
    %v57 = vpack.c.bf16 %v56, %v55
    %v59 = vunpack.c.l.b16 %v57
    %v60 = vunpack.c.h.b16 %v57
    %v61 = vpack.c.b16 %v59, %v59
    %v62 = vpack.c.b16 %v60, %v60
    %vm65 = vcmask 257024
    %66 = vst.msk [vmem:[#allocation5] sm:$0xf] %vm65, %v61
    %67 = vst.msk [vmem:[#allocation5 + $0x4] sm:$0xf] %vm65, %v62
    // Predicated region
    $region14: #{tpu_custom_call.1} parent=1 // pred_check
      _
    $region15: #{tpu_custom_call.1} parent=1 // pred_check_branch
      %69 = sbr.rel (0) target = $region17
    $region16: #{tpu_custom_call.1} parent=1 // pred_region
      %s71 = ssub.s32 128, 128
      %72 = vsyncadd [#allocation4], %s71
      %s73 = sshll.u32 [#allocation5], 4
      %s74 = int_to_ptr.vmem [resolvable:$true] %s73
      %79 = dma.vmem_to_hbm [thread:$0]  %s74, 128, %s2, [#allocation4], 64, 64, 4
    $region17: #{tpu_custom_call.1} parent=1 // pred_fallthru
      _
    // Predicated region
    $region18: #{tpu_custom_call.1} parent=1 // pred_check
      _
    $region19: #{tpu_custom_call.1} parent=1 // pred_check_branch
      %81 = sbr.rel (0) target = $region21
    $region20: #{tpu_custom_call.1} parent=1 // pred_region
      %82 = dma.done [#allocation4], 128
    $region21: #{tpu_custom_call.1} parent=1 // pred_fallthru
      _
    %83 = vsyncpa [#allocation3], 1
    %84 = vsyncpa [#allocation4], 1

</llo_original>
